<compile_context>
chip_gen: v7x
topology: tpu7x:2x2x1
jax: 0.10.0
libtpu: 0.0.40
codegen_flags: <defaults>
</compile_context>

<pallas_src>
import jax
import jax.numpy as jnp
from jax.experimental import pallas as pl
from jax.experimental.pallas import tpu as pltpu

_HIDDEN = 128


def _mlp_kernel(x_ref, p_ref, w1_ref, b1_ref, w2_ref, b2_ref, w3_ref, b3_ref,
                o_ref):
    # Layer 1: fuse the concat into a single K=(x_dim+p_dim) MXU pass.
    # (cheap VPU/store-side copy in VMEM; avoids 2x the vmatmul pushes of two
    #  half-K dots and avoids any HBM concat.)
    xp = jnp.concatenate((x_ref[...], p_ref[...]), axis=1)
    h1 = jnp.dot(xp, w1_ref[...], preferred_element_type=jnp.float32)
    h1 = jnp.maximum(h1 + b1_ref[...], 0.0)
    # Layer 2 (cast back to operand dtype so the bf16 path stays on the bf16 MXU;
    # no-op for f32 operands).
    h2 = jnp.dot(h1.astype(w2_ref.dtype), w2_ref[...],
                 preferred_element_type=jnp.float32) + b2_ref[...]
    h2 = jnp.maximum(h2, 0.0)
    # Layer 3.
    out = jnp.dot(h2.astype(w3_ref.dtype), w3_ref[...],
                  preferred_element_type=jnp.float32) + b3_ref[...]
    o_ref[...] = out.astype(o_ref.dtype)


def _round_up(x, m):
    return -(-x // m) * m


def prepare_params(params, *, operand_dtype=jnp.float32):
    """One-time parameter preparation (hoisted out of the per-call path).

    Weights are cast to `operand_dtype` (e.g. bf16 for HBM-/MXU-friendly
    inference); biases stay f32 (the accumulation dtype) reshaped to
    (1, out_features).
    """
    w1, b1, w2, b2, w3, b3 = params
    return (w1.astype(operand_dtype), b1.reshape(1, -1).astype(jnp.float32),
            w2.astype(operand_dtype), b2.reshape(1, -1).astype(jnp.float32),
            w3.astype(operand_dtype), b3.reshape(1, -1).astype(jnp.float32))


def mutual_information_forward(X, P, prepared_params, *, tile_b=None,
                               out_dtype=None, core_parallel=False):
    """Forward pass of MutualInformation.fc on concat((X, P), axis=1).

    prepared_params: output of prepare_params().  The matmul operand dtype is
    taken from the prepared weights; pass X/P already in that dtype to avoid a
    separate cast pass (an f32->bf16 cast at the boundary is an extra HBM
    read+write over the inputs).

    out_dtype: output dtype; defaults to the operand dtype.
    core_parallel: set True on v7x to shard the batch grid across both
    TensorCores (pltpu.CORE_PARALLEL).
    """
    w1, b1, w2, b2, w3, b3 = prepared_params
    B, x_dim = X.shape
    p_dim = P.shape[1]
    input_dim = w1.shape[0]
    embed_dim = w3.shape[1]
    if x_dim == 0 or p_dim == 0:
        # TODO(synk): zero-width X or P would make a zero-K matmul operand in
        # the fused concat; not supported by this kernel.
        raise ValueError("x_dim and p_dim must both be > 0")
    assert x_dim + p_dim == input_dim

    operand_dtype = w1.dtype
    X = X.astype(operand_dtype)   # no-op if the producer already emits this dtype
    P = P.astype(operand_dtype)
    if out_dtype is None:
        out_dtype = operand_dtype

    # Batch tiling: full-extent single block for small B (always layout-legal),
    # 8/16-row-aligned tiles + pl.cdiv grid (partial last block) for large B.
    row_align = 16 if jnp.dtype(operand_dtype).itemsize == 2 else 8
    max_tile = 1024
    if tile_b is None:
        tile_b = max_tile
    if tile_b >= B:
        tile_b = B                      # single block == full array dims
    else:
        tile_b = _round_up(tile_b, row_align)
        tile_b = min(tile_b, B)
    grid = (pl.cdiv(B, tile_b),)

    tiled = lambda i: (i, 0)       # batch-tiled arrays
    resident = lambda i: (0, 0)    # weights / biases stay resident

    sem = (pltpu.CORE_PARALLEL,) if core_parallel else ("parallel",)

    elt = jnp.dtype(operand_dtype).itemsize
    out_elt = jnp.dtype(out_dtype).itemsize
    flops = 2 * B * (input_dim * _HIDDEN + _HIDDEN * _HIDDEN
                     + _HIDDEN * embed_dim)
    bytes_accessed = (elt * (B * input_dim + input_dim * _HIDDEN
                             + _HIDDEN * _HIDDEN + _HIDDEN * embed_dim)
                      + 4 * (2 * _HIDDEN + embed_dim)   # biases (f32)
                      + out_elt * B * embed_dim)        # output

    out = pl.pallas_call(
        _mlp_kernel,
        out_shape=jax.ShapeDtypeStruct((B, embed_dim), out_dtype),
        grid=grid,
        in_specs=[
            pl.BlockSpec((tile_b, x_dim), tiled),
            pl.BlockSpec((tile_b, p_dim), tiled),
            pl.BlockSpec((input_dim, _HIDDEN), resident),
            pl.BlockSpec((1, _HIDDEN), resident),
            pl.BlockSpec((_HIDDEN, _HIDDEN), resident),
            pl.BlockSpec((1, _HIDDEN), resident),
            pl.BlockSpec((_HIDDEN, embed_dim), resident),
            pl.BlockSpec((1, embed_dim), resident),
        ],
        out_specs=pl.BlockSpec((tile_b, embed_dim), tiled),
        compiler_params=pltpu.CompilerParams(
            dimension_semantics=sem,
            vmem_limit_bytes=32 * 1024 * 1024,
        ),
        cost_estimate=pl.CostEstimate(
            flops=flops, transcendentals=0, bytes_accessed=bytes_accessed),
    )(X, P, w1, b1, w2, b2, w3, b3)

    return out


def init_params(key, input_dim, embed_dim):
    """Deterministic init mimicking nn.Linear default (uniform +/- 1/sqrt(fan_in)).

    Weights stored as (in_features, out_features); biases as (1, out_features).
    """
    dims = [(input_dim, _HIDDEN), (_HIDDEN, _HIDDEN), (_HIDDEN, embed_dim)]
    params = []
    for (fan_in, fan_out) in dims:
        key, kw, kb = jax.random.split(key, 3)
        bound = 1.0 / jnp.sqrt(float(fan_in))
        w = jax.random.uniform(kw, (fan_in, fan_out), jnp.float32, -bound, bound)
        b = jax.random.uniform(kb, (1, fan_out), jnp.float32, -bound, bound)
        params += [w, b]
    return tuple(params)


def _reference_forward(X, P, params):
    w1, b1, w2, b2, w3, b3 = params
    x = jnp.concatenate((X, P), axis=1)
    h1 = jax.nn.relu(x @ w1 + b1)
    h2 = jax.nn.relu(h1 @ w2 + b2)
    return h2 @ w3 + b3


# TODO(synk): the PyTorch module's train() (MSELoss + SGD/momentum step) is
# host-side training glue, not part of the forward pass; only forward() is
# implemented here.

if __name__ == "__main__":
    key = jax.random.PRNGKey(0)
    k_x, k_p, k_params = jax.random.split(key, 3)

    B, x_dim, p_dim, embed_dim = 8, 16, 16, 32
    input_dim = x_dim + p_dim

    X = jax.random.normal(k_x, (B, x_dim), jnp.float32)
    P = jax.random.normal(k_p, (B, p_dim), jnp.float32)
    params = init_params(k_params, input_dim, embed_dim)

    ref = _reference_forward(X, P, params)

    # f32 path: single-block grid, strict check against the reference.
    prep_f32 = prepare_params(params, operand_dtype=jnp.float32)
    out = mutual_information_forward(X, P, prep_f32)
    out = jax.block_until_ready(out)
    assert out.shape == (B, embed_dim)
    assert jnp.allclose(out, ref, atol=1e-5, rtol=1e-5)

    # Multi-block path with a partial last block (B=24, tile_b=16): exercises
    # the pl.cdiv grid / boundary masking without any wrapper-side padding.
    B2 = 24
    k_x2, k_p2 = jax.random.split(jax.random.PRNGKey(1), 2)
    X2 = jax.random.normal(k_x2, (B2, x_dim), jnp.float32)
    P2 = jax.random.normal(k_p2, (B2, p_dim), jnp.float32)
    ref2 = _reference_forward(X2, P2, params)
    out2 = jax.block_until_ready(
        mutual_information_forward(X2, P2, prep_f32, tile_b=16))
    assert out2.shape == (B2, embed_dim)
    assert jnp.allclose(out2, ref2, atol=1e-5, rtol=1e-5)

    # bf16-operand path (f32 accumulation, bf16 output): producer-side bf16
    # inputs, loose check.
    prep_bf16 = prepare_params(params, operand_dtype=jnp.bfloat16)
    out_bf16 = mutual_information_forward(
        X.astype(jnp.bfloat16), P.astype(jnp.bfloat16), prep_bf16)
    out_bf16 = jax.block_until_ready(out_bf16)
    assert out_bf16.shape == (B, embed_dim)
    assert out_bf16.dtype == jnp.bfloat16
    assert jnp.allclose(out_bf16.astype(jnp.float32), ref, atol=2e-1, rtol=5e-2)

    print("KERNEL_OK")
</pallas_src>

<mosaic_0001>
module attributes {stable_mosaic.version = 11 : i64} {
  func.func @_mlp_kernel(%arg0: i32, %arg1: memref<8x16xf32, #tpu.memory_space<vmem>>, %arg2: memref<8x16xf32, #tpu.memory_space<vmem>>, %arg3: memref<32x128xf32, #tpu.memory_space<vmem>>, %arg4: memref<1x128xf32, #tpu.memory_space<vmem>>, %arg5: memref<128x128xf32, #tpu.memory_space<vmem>>, %arg6: memref<1x128xf32, #tpu.memory_space<vmem>>, %arg7: memref<128x32xf32, #tpu.memory_space<vmem>>, %arg8: memref<1x32xf32, #tpu.memory_space<vmem>>, %arg9: memref<8x32xf32, #tpu.memory_space<vmem>>) attributes {dimension_semantics = [#tpu.dimension_semantics<parallel>], iteration_bounds = array<i64: 1>, scalar_prefetch = 0 : i64, scratch_operands = 0 : i64, tpu.core_type = #tpu.core_type<tc>, window_params = [{transform_indices = @transform_0, window_bounds = array<i64: 8, 16>}, {transform_indices = @transform_1, window_bounds = array<i64: 8, 16>}, {pipeline_mode = #tpu.pipeline_mode<synchronous>, transform_indices = @transform_2, window_bounds = array<i64: 32, 128>}, {pipeline_mode = #tpu.pipeline_mode<synchronous>, transform_indices = @transform_3, window_bounds = array<i64: 1, 128>}, {pipeline_mode = #tpu.pipeline_mode<synchronous>, transform_indices = @transform_4, window_bounds = array<i64: 128, 128>}, {pipeline_mode = #tpu.pipeline_mode<synchronous>, transform_indices = @transform_5, window_bounds = array<i64: 1, 128>}, {pipeline_mode = #tpu.pipeline_mode<synchronous>, transform_indices = @transform_6, window_bounds = array<i64: 128, 32>}, {pipeline_mode = #tpu.pipeline_mode<synchronous>, transform_indices = @transform_7, window_bounds = array<i64: 1, 32>}, {transform_indices = @transform_8, window_bounds = array<i64: 8, 32>}]} {
    %c0 = arith.constant 0 : index
    %c0_0 = arith.constant 0 : index
    %0 = vector.load %arg1[%c0, %c0_0] : memref<8x16xf32, #tpu.memory_space<vmem>>, vector<8x16xf32>
    %c0_1 = arith.constant 0 : index
    %c0_2 = arith.constant 0 : index
    %1 = vector.load %arg2[%c0_1, %c0_2] : memref<8x16xf32, #tpu.memory_space<vmem>>, vector<8x16xf32>
    %2 = tpu.concatenate %0, %1 in 1 : vector<8x16xf32>, vector<8x16xf32> -> vector<8x32xf32>
    %c0_3 = arith.constant 0 : index
    %c0_4 = arith.constant 0 : index
    %3 = vector.load %arg3[%c0_3, %c0_4] : memref<32x128xf32, #tpu.memory_space<vmem>>, vector<32x128xf32>
    %cst = arith.constant dense<0.000000e+00> : vector<8x128xf32>
    %4 = tpu.matmul %2, %3, %cst {dimension_numbers = #tpu.dot_dimension_numbers<[1], [0], [0], [1], [0, 0, 1, 1], [], []>} : vector<8x32xf32>, vector<32x128xf32>, vector<8x128xf32> -> vector<8x128xf32>
    %c0_5 = arith.constant 0 : index
    %c0_6 = arith.constant 0 : index
    %5 = vector.load %arg4[%c0_5, %c0_6] : memref<1x128xf32, #tpu.memory_space<vmem>>, vector<1x128xf32>
    %6 = vector.broadcast %5 : vector<1x128xf32> to vector<8x128xf32>
    %7 = arith.addf %4, %6 : vector<8x128xf32>
    %cst_7 = arith.constant 0.000000e+00 : f32
    %8 = vector.broadcast %cst_7 : f32 to vector<8x128xf32>
    %9 = arith.maximumf %7, %8 : vector<8x128xf32>
    %c0_8 = arith.constant 0 : index
    %c0_9 = arith.constant 0 : index
    %10 = vector.load %arg5[%c0_8, %c0_9] : memref<128x128xf32, #tpu.memory_space<vmem>>, vector<128x128xf32>
    %cst_10 = arith.constant dense<0.000000e+00> : vector<8x128xf32>
    %11 = tpu.matmul %9, %10, %cst_10 {dimension_numbers = #tpu.dot_dimension_numbers<[1], [0], [0], [1], [0, 0, 1, 1], [], []>} : vector<8x128xf32>, vector<128x128xf32>, vector<8x128xf32> -> vector<8x128xf32>
    %c0_11 = arith.constant 0 : index
    %c0_12 = arith.constant 0 : index
    %12 = vector.load %arg6[%c0_11, %c0_12] : memref<1x128xf32, #tpu.memory_space<vmem>>, vector<1x128xf32>
    %13 = vector.broadcast %12 : vector<1x128xf32> to vector<8x128xf32>
    %14 = arith.addf %11, %13 : vector<8x128xf32>
    %cst_13 = arith.constant 0.000000e+00 : f32
    %15 = vector.broadcast %cst_13 : f32 to vector<8x128xf32>
    %16 = arith.maximumf %14, %15 : vector<8x128xf32>
    %c0_14 = arith.constant 0 : index
    %c0_15 = arith.constant 0 : index
    %17 = vector.load %arg7[%c0_14, %c0_15] : memref<128x32xf32, #tpu.memory_space<vmem>>, vector<128x32xf32>
    %cst_16 = arith.constant dense<0.000000e+00> : vector<8x32xf32>
    %18 = tpu.matmul %16, %17, %cst_16 {dimension_numbers = #tpu.dot_dimension_numbers<[1], [0], [0], [1], [0, 0, 1, 1], [], []>} : vector<8x128xf32>, vector<128x32xf32>, vector<8x32xf32> -> vector<8x32xf32>
    %c0_17 = arith.constant 0 : index
    %c0_18 = arith.constant 0 : index
    %19 = vector.load %arg8[%c0_17, %c0_18] : memref<1x32xf32, #tpu.memory_space<vmem>>, vector<1x32xf32>
    %20 = vector.broadcast %19 : vector<1x32xf32> to vector<8x32xf32>
    %21 = arith.addf %18, %20 : vector<8x32xf32>
    %c0_19 = arith.constant 0 : index
    %c0_20 = arith.constant 0 : index
    %22 = vector.load %arg9[%c0_19, %c0_20] : memref<8x32xf32, #tpu.memory_space<vmem>>, vector<8x32xf32>
    tpu.vector_store %arg9[%c0_19, %c0_20], %21 {strides = array<i32>} : memref<8x32xf32, #tpu.memory_space<vmem>>, vector<8x32xf32>,
    return
  }
  func.func @transform_0(%arg0: i32) -> (i32, i32) {
    %c0_i32 = arith.constant 0 : i32
    %c0_i32_0 = arith.constant 0 : i32
    return %arg0, %c0_i32 : i32, i32
  }
  func.func @transform_1(%arg0: i32) -> (i32, i32) {
    %c0_i32 = arith.constant 0 : i32
    %c0_i32_0 = arith.constant 0 : i32
    return %arg0, %c0_i32 : i32, i32
  }
  func.func @transform_2(%arg0: i32) -> (i32, i32) {
    %c0_i32 = arith.constant 0 : i32
    %c0_i32_0 = arith.constant 0 : i32
    %c0_i32_1 = arith.constant 0 : i32
    return %c0_i32, %c0_i32_0 : i32, i32
  }
  func.func @transform_3(%arg0: i32) -> (i32, i32) {
    %c0_i32 = arith.constant 0 : i32
    %c0_i32_0 = arith.constant 0 : i32
    %c0_i32_1 = arith.constant 0 : i32
    return %c0_i32, %c0_i32_0 : i32, i32
  }
  func.func @transform_4(%arg0: i32) -> (i32, i32) {
    %c0_i32 = arith.constant 0 : i32
    %c0_i32_0 = arith.constant 0 : i32
    %c0_i32_1 = arith.constant 0 : i32
    return %c0_i32, %c0_i32_0 : i32, i32
  }
  func.func @transform_5(%arg0: i32) -> (i32, i32) {
    %c0_i32 = arith.constant 0 : i32
    %c0_i32_0 = arith.constant 0 : i32
    %c0_i32_1 = arith.constant 0 : i32
    return %c0_i32, %c0_i32_0 : i32, i32
  }
  func.func @transform_6(%arg0: i32) -> (i32, i32) {
    %c0_i32 = arith.constant 0 : i32
    %c0_i32_0 = arith.constant 0 : i32
    %c0_i32_1 = arith.constant 0 : i32
    return %c0_i32, %c0_i32_0 : i32, i32
  }
  func.func @transform_7(%arg0: i32) -> (i32, i32) {
    %c0_i32 = arith.constant 0 : i32
    %c0_i32_0 = arith.constant 0 : i32
    %c0_i32_1 = arith.constant 0 : i32
    return %c0_i32, %c0_i32_0 : i32, i32
  }
  func.func @transform_8(%arg0: i32) -> (i32, i32) {
    %c0_i32 = arith.constant 0 : i32
    %c0_i32_0 = arith.constant 0 : i32
    return %arg0, %c0_i32 : i32, i32
  }
}

</mosaic_0001>

<llo_original>
// kernel: tpu_custom_call.1
$region0: #{tpu_custom_call.1}
  #allocation0 [shape = 'u32[]', space=smem, size = 0x4, offset = 0x4, fixed_abs, tag = 'smem constant byte address 0x4 - core index']
  #allocation1 [shape = 'u32[144,128]{1,0:T(1,128)}', space=vmem, size = 0x12000, scoped, tag = 'internal scratch']
  %s0 = inlined_call_operand.vmem [shape: f32[8,16], index: 0, kind: input, shape index: {}]
  %s1 = inlined_call_operand.hbm [shape: f32[8,16], index: 1, kind: input, shape index: {}]
  %s2 = inlined_call_operand.vmem [shape: f32[32,128], index: 2, kind: input, shape index: {}]
  %s3 = inlined_call_operand.vmem [shape: f32[1,128], index: 3, kind: input, shape index: {}]
  %s4 = inlined_call_operand.vmem [shape: f32[128,128], index: 4, kind: input, shape index: {}]
  %s5 = inlined_call_operand.vmem [shape: f32[1,128], index: 5, kind: input, shape index: {}]
  %s6 = inlined_call_operand.vmem [shape: f32[128,32], index: 6, kind: input, shape index: {}]
  %s7 = inlined_call_operand.vmem [shape: f32[1,32], index: 7, kind: input, shape index: {}]
  %s8 = inlined_call_operand.hbm [shape: f32[8,32], index: 8, kind: output, shape index: {}]
  %s9 = sld [smem:[#allocation0]]
  $region46: #{tpu_custom_call.1} parent=0
    _
  %s11 = ssub.s32 1, %s9
  %s12 = scalar_select 0, %s11, %s9
  $region1: #{tpu_custom_call.1} parent=0
    #allocation2 [shape = 'u8[4096]{0}', space=vmem, size = 0x1000, scoped, tag = 'input window, operand 1, single buffered']
    #allocation3 [shape = 's32[1]{0}', space=sflag, size = 0x4, scoped, tag = 'scoped memory for tpu_custom_call.1']
    #allocation4 [shape = 's32[1]{0}', space=sflag, size = 0x4, scoped, tag = 'scoped memory for tpu_custom_call.1']
    #allocation5 [shape = 'u8[4096]{0}', space=vmem, size = 0x1000, scoped, tag = 'output window, operand 0, single buffered']
    %13 = vsyncpa [#allocation3], 0
    %14 = vsyncpa [#allocation4], 0
    // Predicated region
    $region2: #{tpu_custom_call.1} parent=1 // pred_check
      _
    $region3: #{tpu_custom_call.1} parent=1 // pred_check_branch
      %16 = sbr.rel (0) target = $region5
    $region4: #{tpu_custom_call.1} parent=1 // pred_region
      _
    $region5: #{tpu_custom_call.1} parent=1 // pred_fallthru
      _
    // Predicated region
    $region6: #{tpu_custom_call.1} parent=1 // pred_check
      _
    $region7: #{tpu_custom_call.1} parent=1 // pred_check_branch
      %18 = sbr.rel (0) target = $region9
    $region8: #{tpu_custom_call.1} parent=1 // pred_region
      %s20 = ssub.s32 128, 128
      %21 = vsyncadd [#allocation3], %s20
      %s23 = sshll.u32 [#allocation2], 4
      %s24 = int_to_ptr.vmem [resolvable:$true] %s23
      %26 = dma.hbm_to_vmem [thread:$0]  %s1, 128, %s24, [#allocation3]
    $region9: #{tpu_custom_call.1} parent=1 // pred_fallthru
      _
    // Predicated region
    $region10: #{tpu_custom_call.1} parent=1 // pred_check
      _
    $region11: #{tpu_custom_call.1} parent=1 // pred_check_branch
      %28 = sbr.rel (0) target = $region13
    $region12: #{tpu_custom_call.1} parent=1 // pred_region
      _
    $region13: #{tpu_custom_call.1} parent=1 // pred_fallthru
      _
    // Predicated region
    $region14: #{tpu_custom_call.1} parent=1 // pred_check
      _
    $region15: #{tpu_custom_call.1} parent=1 // pred_check_branch
      %30 = sbr.rel (0) target = $region17
    $region16: #{tpu_custom_call.1} parent=1 // pred_region
      _
    $region17: #{tpu_custom_call.1} parent=1 // pred_fallthru
      _
    // Predicated region
    $region18: #{tpu_custom_call.1} parent=1 // pred_check
      _
    $region19: #{tpu_custom_call.1} parent=1 // pred_check_branch
      %32 = sbr.rel (0) target = $region21
    $region20: #{tpu_custom_call.1} parent=1 // pred_region
      _
    $region21: #{tpu_custom_call.1} parent=1 // pred_fallthru
      _
    // Predicated region
    $region22: #{tpu_custom_call.1} parent=1 // pred_check
      _
    $region23: #{tpu_custom_call.1} parent=1 // pred_check_branch
      %34 = sbr.rel (0) target = $region25
    $region24: #{tpu_custom_call.1} parent=1 // pred_region
      _
    $region25: #{tpu_custom_call.1} parent=1 // pred_fallthru
      _
    // Predicated region
    $region26: #{tpu_custom_call.1} parent=1 // pred_check
      _
    $region27: #{tpu_custom_call.1} parent=1 // pred_check_branch
      %36 = sbr.rel (0) target = $region29
    $region28: #{tpu_custom_call.1} parent=1 // pred_region
      _
    $region29: #{tpu_custom_call.1} parent=1 // pred_fallthru
      _
    // Predicated region
    $region30: #{tpu_custom_call.1} parent=1 // pred_check
      _
    $region31: #{tpu_custom_call.1} parent=1 // pred_check_branch
      %38 = sbr.rel (0) target = $region33
    $region32: #{tpu_custom_call.1} parent=1 // pred_region
      _
    $region33: #{tpu_custom_call.1} parent=1 // pred_fallthru
      _
    // Predicated region
    $region34: #{tpu_custom_call.1} parent=1 // pred_check
      _
    $region35: #{tpu_custom_call.1} parent=1 // pred_check_branch
      %40 = sbr.rel (0) target = $region37
    $region36: #{tpu_custom_call.1} parent=1 // pred_region
      %41 = dma.done [#allocation3], 128
    $region37: #{tpu_custom_call.1} parent=1 // pred_fallthru
      _
    %v42 = vld [vmem:[%s0] sm:$0xff]
    %v43 = vld [vmem:[#allocation2] sm:$0xff]
    %45 = vrot.lane.b32.xlu0 %v43, 16
    %v46 = vpop.permute.xlu0 %45
    %vm48 = vcmask 130048
    %v49 = vsel %vm48, %v42, %v46
    %v50 = vld [vmem:[%s2] sm:$0xff]
    %v51 = vld [vmem:[%s2 + $0x8] sm:$0xff]
    %v52 = vld [vmem:[%s2 + $0x10] sm:$0xff]
    %v53 = vld [vmem:[%s2 + $0x18] sm:$0xff]
    %v54 = vld [vmem:[%s3] sm:$0x1]
    %v56 = vlaneseq
    %v57 = vshrl.u32 %v56, 7
    %v58 = vsub.s32 0, %v57
    %v59 = vrot.slane %v54, %v58
    %vm61 = vcmask 261120
    %v63 = vsel %vm61, %v49, 0
    %65 = vmatprep.subr.mxu0 0.0
    %66 = vmatpush1.msra.mxu0 %v50
    %67 = vmatprep.subr.mxu0 0.0
    %68 = vmatpush1.msra.mxu0 %v51
    %69 = vmatprep.subr.mxu0 0.0
    %70 = vmatpush1.msra.mxu0 %v52
    %71 = vmatprep.subr.mxu0 0.0
    %72 = vmatpush1.msra.mxu0 %v53
    %73 = vmatprep.subr.mxu0 0.0
    %74 = vmatpush1.msra.mxu0 0.0
    %75 = vmatprep.subr.mxu0 0.0
    %76 = vmatpush1.msra.mxu0 0.0
    %77 = vmatprep.subr.mxu0 0.0
    %78 = vmatpush1.msra.mxu0 0.0
    %79 = vmatprep.subr.mxu0 0.0
    %80 = vmatpush1.msra.mxu0 0.0
    %81 = vmatprep.subr.mxu0 0.0
    %82 = vmatpush1.msra.mxu0 0.0
    %83 = vmatprep.subr.mxu0 0.0
    %84 = vmatpush1.msra.mxu0 0.0
    %85 = vmatprep.subr.mxu0 0.0
    %86 = vmatpush1.msra.mxu0 0.0
    %87 = vmatprep.subr.mxu0 0.0
    %88 = vmatpush1.msra.mxu0 0.0
    %89 = vmatprep.subr.mxu0 0.0
    %90 = vmatpush1.msra.mxu0 0.0
    %91 = vmatprep.subr.mxu0 0.0
    %92 = vmatpush1.msra.mxu0 0.0
    %93 = vmatprep.subr.mxu0 0.0
    %94 = vmatpush1.msra.mxu0 0.0
    %95 = vmatprep.subr.mxu0 0.0
    %96 = vmatpush1.msra.mxu0 0.0
    %97 = vmatprep.subr.mxu0 0.0
    %98 = vmatpush1.msra.mxu0 0.0
    %99 = vmatprep.subr.mxu0 0.0
    %100 = vmatpush1.msra.mxu0 0.0
    %101 = vmatprep.subr.mxu0 0.0
    %102 = vmatpush1.msra.mxu0 0.0
    %103 = vmatprep.subr.mxu0 0.0
    %104 = vmatpush1.msra.mxu0 0.0
    %105 = vmatprep.subr.mxu0 0.0
    %106 = vmatpush1.msra.mxu0 0.0
    %107 = vmatprep.subr.mxu0 0.0
    %108 = vmatpush1.msra.mxu0 0.0
    %109 = vmatprep.subr.mxu0 0.0
    %110 = vmatpush1.msra.mxu0 0.0
    %111 = vmatprep.subr.mxu0 0.0
    %112 = vmatpush1.msra.mxu0 0.0
    %113 = vmatprep.subr.mxu0 0.0
    %114 = vmatpush1.msra.mxu0 0.0
    %115 = vmatprep.subr.mxu0 0.0
    %116 = vmatpush1.msra.mxu0 0.0
    %117 = vmatprep.subr.mxu0 0.0
    %118 = vmatpush1.msra.mxu0 0.0
    %119 = vmatprep.subr.mxu0 0.0
    %120 = vmatpush1.msra.mxu0 0.0
    %121 = vmatprep.subr.mxu0 0.0
    %122 = vmatpush1.msra.mxu0 0.0
    %123 = vmatprep.subr.mxu0 0.0
    %124 = vmatpush1.msra.mxu0 0.0
    %125 = vmatprep.subr.mxu0 0.0
    %126 = vmatpush1.msra.mxu0 0.0
    %127 = vmatprep.subr.mxu0 0.0
    %128 = vmatpush1.msra.mxu0 0.0
    %129 = vmatprep.mubr.f32.mxu0 0.0
    %130 = vmatmul.mubr.f32.gmra.mrb[0].mxu0 %v63
    %v131 = vpop.f32.mrb[0].mxu0
    %v132 = vadd.f32 %v59, %v131
    %v133 = vpop.f32.mrb[0].mxu0
    %134 = vdwg.mxu0
    %v135 = vmax.f32 %v132, 0.0
    %v136 = vld [vmem:[%s4] sm:$0xff]
    %v137 = vld [vmem:[%s4 + $0x8] sm:$0xff]
    %v138 = vld [vmem:[%s4 + $0x10] sm:$0xff]
    %v139 = vld [vmem:[%s4 + $0x18] sm:$0xff]
    %v140 = vld [vmem:[%s4 + $0x20] sm:$0xff]
    %v141 = vld [vmem:[%s4 + $0x28] sm:$0xff]
    %v142 = vld [vmem:[%s4 + $0x30] sm:$0xff]
    %v143 = vld [vmem:[%s4 + $0x38] sm:$0xff]
    %v144 = vld [vmem:[%s4 + $0x40] sm:$0xff]
    %v145 = vld [vmem:[%s4 + $0x48] sm:$0xff]
    %v146 = vld [vmem:[%s4 + $0x50] sm:$0xff]
    %v147 = vld [vmem:[%s4 + $0x58] sm:$0xff]
    %v148 = vld [vmem:[%s4 + $0x60] sm:$0xff]
    %v149 = vld [vmem:[%s4 + $0x68] sm:$0xff]
    %v150 = vld [vmem:[%s4 + $0x70] sm:$0xff]
    %v151 = vld [vmem:[%s4 + $0x78] sm:$0xff]
    %v152 = vld [vmem:[%s5] sm:$0x1]
    %v154 = vlaneseq
    %v155 = vshrl.u32 %v154, 7
    %v156 = vsub.s32 0, %v155
    %v157 = vrot.slane %v152, %v156
    %159 = vmatprep.subr.mxu0 0.0
    %160 = vmatpush1.msra.mxu0 %v136
    %161 = vmatprep.subr.mxu0 0.0
    %162 = vmatpush1.msra.mxu0 %v137
    %163 = vmatprep.subr.mxu0 0.0
    %164 = vmatpush1.msra.mxu0 %v138
    %165 = vmatprep.subr.mxu0 0.0
    %166 = vmatpush1.msra.mxu0 %v139
    %167 = vmatprep.subr.mxu0 0.0
    %168 = vmatpush1.msra.mxu0 %v140
    %169 = vmatprep.subr.mxu0 0.0
    %170 = vmatpush1.msra.mxu0 %v141
    %171 = vmatprep.subr.mxu0 0.0
    %172 = vmatpush1.msra.mxu0 %v142
    %173 = vmatprep.subr.mxu0 0.0
    %174 = vmatpush1.msra.mxu0 %v143
    %175 = vmatprep.subr.mxu0 0.0
    %176 = vmatpush1.msra.mxu0 %v144
    %177 = vmatprep.subr.mxu0 0.0
    %178 = vmatpush1.msra.mxu0 %v145
    %179 = vmatprep.subr.mxu0 0.0
    %180 = vmatpush1.msra.mxu0 %v146
    %181 = vmatprep.subr.mxu0 0.0
    %182 = vmatpush1.msra.mxu0 %v147
    %183 = vmatprep.subr.mxu0 0.0
    %184 = vmatpush1.msra.mxu0 %v148
    %185 = vmatprep.subr.mxu0 0.0
    %186 = vmatpush1.msra.mxu0 %v149
    %187 = vmatprep.subr.mxu0 0.0
    %188 = vmatpush1.msra.mxu0 %v150
    %189 = vmatprep.subr.mxu0 0.0
    %190 = vmatpush1.msra.mxu0 %v151
    %191 = vmatprep.subr.mxu0 0.0
    %192 = vmatpush1.msra.mxu0 0.0
    %193 = vmatprep.subr.mxu0 0.0
    %194 = vmatpush1.msra.mxu0 0.0
    %195 = vmatprep.subr.mxu0 0.0
    %196 = vmatpush1.msra.mxu0 0.0
    %197 = vmatprep.subr.mxu0 0.0
    %198 = vmatpush1.msra.mxu0 0.0
    %199 = vmatprep.subr.mxu0 0.0
    %200 = vmatpush1.msra.mxu0 0.0
    %201 = vmatprep.subr.mxu0 0.0
    %202 = vmatpush1.msra.mxu0 0.0
    %203 = vmatprep.subr.mxu0 0.0
    %204 = vmatpush1.msra.mxu0 0.0
    %205 = vmatprep.subr.mxu0 0.0
    %206 = vmatpush1.msra.mxu0 0.0
    %207 = vmatprep.subr.mxu0 0.0
    %208 = vmatpush1.msra.mxu0 0.0
    %209 = vmatprep.subr.mxu0 0.0
    %210 = vmatpush1.msra.mxu0 0.0
    %211 = vmatprep.subr.mxu0 0.0
    %212 = vmatpush1.msra.mxu0 0.0
    %213 = vmatprep.subr.mxu0 0.0
    %214 = vmatpush1.msra.mxu0 0.0
    %215 = vmatprep.subr.mxu0 0.0
    %216 = vmatpush1.msra.mxu0 0.0
    %217 = vmatprep.subr.mxu0 0.0
    %218 = vmatpush1.msra.mxu0 0.0
    %219 = vmatprep.subr.mxu0 0.0
    %220 = vmatpush1.msra.mxu0 0.0
    %221 = vmatprep.subr.mxu0 0.0
    %222 = vmatpush1.msra.mxu0 0.0
    %223 = vmatprep.mubr.f32.mxu0 0.0
    %224 = vmatmul.mubr.f32.gmra.mrb[0].mxu0 %v135
    %v225 = vpop.f32.mrb[0].mxu0
    %v226 = vadd.f32 %v157, %v225
    %v227 = vpop.f32.mrb[0].mxu0
    %228 = vdwg.mxu0
    %v229 = vmax.f32 %v226, 0.0
    %v230 = vld [vmem:[%s6] sm:$0xff]
    %v231 = vld [vmem:[%s6 + $0x8] sm:$0xff]
    %v232 = vld [vmem:[%s6 + $0x10] sm:$0xff]
    %v233 = vld [vmem:[%s6 + $0x18] sm:$0xff]
    %v234 = vld [vmem:[%s6 + $0x20] sm:$0xff]
    %v235 = vld [vmem:[%s6 + $0x28] sm:$0xff]
    %v236 = vld [vmem:[%s6 + $0x30] sm:$0xff]
    %v237 = vld [vmem:[%s6 + $0x38] sm:$0xff]
    %v238 = vld [vmem:[%s6 + $0x40] sm:$0xff]
    %v239 = vld [vmem:[%s6 + $0x48] sm:$0xff]
    %v240 = vld [vmem:[%s6 + $0x50] sm:$0xff]
    %v241 = vld [vmem:[%s6 + $0x58] sm:$0xff]
    %v242 = vld [vmem:[%s6 + $0x60] sm:$0xff]
    %v243 = vld [vmem:[%s6 + $0x68] sm:$0xff]
    %v244 = vld [vmem:[%s6 + $0x70] sm:$0xff]
    %v245 = vld [vmem:[%s6 + $0x78] sm:$0xff]
    %v246 = vld [vmem:[%s7] sm:$0x1]
    %v248 = vlaneseq
    %v249 = vshrl.u32 %v248, 7
    %v250 = vsub.s32 0, %v249
    %v251 = vrot.slane %v246, %v250
    %253 = vmatprep.subr.mxu0 0.0
    %254 = vmatpush1.msra.mxu0 %v230
    %255 = vmatprep.subr.mxu0 0.0
    %256 = vmatpush1.msra.mxu0 %v231
    %257 = vmatprep.subr.mxu0 0.0
    %258 = vmatpush1.msra.mxu0 %v232
    %259 = vmatprep.subr.mxu0 0.0
    %260 = vmatpush1.msra.mxu0 %v233
    %261 = vmatprep.subr.mxu0 0.0
    %262 = vmatpush1.msra.mxu0 %v234
    %263 = vmatprep.subr.mxu0 0.0
    %264 = vmatpush1.msra.mxu0 %v235
    %265 = vmatprep.subr.mxu0 0.0
    %266 = vmatpush1.msra.mxu0 %v236
    %267 = vmatprep.subr.mxu0 0.0
    %268 = vmatpush1.msra.mxu0 %v237
    %269 = vmatprep.subr.mxu0 0.0
    %270 = vmatpush1.msra.mxu0 %v238
    %271 = vmatprep.subr.mxu0 0.0
    %272 = vmatpush1.msra.mxu0 %v239
    %273 = vmatprep.subr.mxu0 0.0
    %274 = vmatpush1.msra.mxu0 %v240
    %275 = vmatprep.subr.mxu0 0.0
    %276 = vmatpush1.msra.mxu0 %v241
    %277 = vmatprep.subr.mxu0 0.0
    %278 = vmatpush1.msra.mxu0 %v242
    %279 = vmatprep.subr.mxu0 0.0
    %280 = vmatpush1.msra.mxu0 %v243
    %281 = vmatprep.subr.mxu0 0.0
    %282 = vmatpush1.msra.mxu0 %v244
    %283 = vmatprep.subr.mxu0 0.0
    %284 = vmatpush1.msra.mxu0 %v245
    %285 = vmatprep.subr.mxu0 0.0
    %286 = vmatpush1.msra.mxu0 0.0
    %287 = vmatprep.subr.mxu0 0.0
    %288 = vmatpush1.msra.mxu0 0.0
    %289 = vmatprep.subr.mxu0 0.0
    %290 = vmatpush1.msra.mxu0 0.0
    %291 = vmatprep.subr.mxu0 0.0
    %292 = vmatpush1.msra.mxu0 0.0
    %293 = vmatprep.subr.mxu0 0.0
    %294 = vmatpush1.msra.mxu0 0.0
    %295 = vmatprep.subr.mxu0 0.0
    %296 = vmatpush1.msra.mxu0 0.0
    %297 = vmatprep.subr.mxu0 0.0
    %298 = vmatpush1.msra.mxu0 0.0
    %299 = vmatprep.subr.mxu0 0.0
    %300 = vmatpush1.msra.mxu0 0.0
    %301 = vmatprep.subr.mxu0 0.0
    %302 = vmatpush1.msra.mxu0 0.0
    %303 = vmatprep.subr.mxu0 0.0
    %304 = vmatpush1.msra.mxu0 0.0
    %305 = vmatprep.subr.mxu0 0.0
    %306 = vmatpush1.msra.mxu0 0.0
    %307 = vmatprep.subr.mxu0 0.0
    %308 = vmatpush1.msra.mxu0 0.0
    %309 = vmatprep.subr.mxu0 0.0
    %310 = vmatpush1.msra.mxu0 0.0
    %311 = vmatprep.subr.mxu0 0.0
    %312 = vmatpush1.msra.mxu0 0.0
    %313 = vmatprep.subr.mxu0 0.0
    %314 = vmatpush1.msra.mxu0 0.0
    %315 = vmatprep.subr.mxu0 0.0
    %316 = vmatpush1.msra.mxu0 0.0
    %317 = vmatprep.mubr.f32.mxu0 0.0
    %318 = vmatmul.mubr.f32.gmra.mrb[0].mxu0 %v229
    %v319 = vpop.f32.mrb[0].mxu0
    %v320 = vadd.f32 %v251, %v319
    %v321 = vpop.f32.mrb[0].mxu0
    %322 = vdwg.mxu0
    %323 = vst.msk [vmem:[#allocation5] sm:$0xff] %vm61, %v320
    // Predicated region
    $region38: #{tpu_custom_call.1} parent=1 // pred_check
      _
    $region39: #{tpu_custom_call.1} parent=1 // pred_check_branch
      %325 = sbr.rel (0) target = $region41
    $region40: #{tpu_custom_call.1} parent=1 // pred_region
      %s327 = ssub.s32 128, 128
      %328 = vsyncadd [#allocation4], %s327
      %s330 = sshll.u32 [#allocation5], 4
      %s331 = int_to_ptr.vmem [resolvable:$true] %s330
      %333 = dma.vmem_to_hbm [thread:$0]  %s331, 128, %s8, [#allocation4]
    $region41: #{tpu_custom_call.1} parent=1 // pred_fallthru
      _
    // Predicated region
    $region42: #{tpu_custom_call.1} parent=1 // pred_check
      _
    $region43: #{tpu_custom_call.1} parent=1 // pred_check_branch
      %335 = sbr.rel (0) target = $region45
    $region44: #{tpu_custom_call.1} parent=1 // pred_region
      %336 = dma.done [#allocation4], 128
    $region45: #{tpu_custom_call.1} parent=1 // pred_fallthru
      _
    %337 = vsyncpa [#allocation3], 1
    %338 = vsyncpa [#allocation4], 1

</llo_original>
